<compile_context>
chip_gen: v6e
topology: v6e:2x2x1
jax: 0.10.0
libtpu: 0.0.40
codegen_flags: <defaults>
</compile_context>

<pallas_src>
import math
from functools import partial

import jax
import jax.numpy as jnp
from jax import lax
from jax.experimental import pallas as pl
from jax.experimental.pallas import tpu as pltpu

EPS = 1e-5
AFFINE = True
SUBTRACT_LAST = False  # default constructor argument; only the mean/stdev path is implemented
# TODO(synk): subtract_last=True branch (uses x[:, -1, :] instead of the mean) is not
# exercised by the default constructor and is not implemented here.


# --------------------------------------------------------------------------- budgets

_TPU_INFO_CACHE = []


def _budgets(block_bytes_target=None):
    """Per-generation block-size target and scoped-VMEM limit."""
    if not _TPU_INFO_CACHE:
        try:
            phys = pltpu.get_tpu_info().vmem_capacity_bytes
        except Exception:  # conservative fallback: v7x-sized budgets are safe everywhere
            phys = 64 * 1024 * 1024
        _TPU_INFO_CACHE.append(phys)
    phys = _TPU_INFO_CACHE[0]
    if phys >= 100 * 1024 * 1024:                     # v5e / v6e: 128 MiB physical VMEM
        target, limit = 4 * 1024 * 1024, 64 * 1024 * 1024
    else:                                             # v7x: 64 MiB physical VMEM
        target, limit = 2 * 1024 * 1024, 32 * 1024 * 1024
    if block_bytes_target is not None:
        target = int(block_bytes_target)
    return target, limit


# ---------------------------------------------------------------------- tiling helpers

def _pick_lane_pack(L, C):
    """Minimal lane pack r = 128 // gcd(C, 128).

    r consecutive time steps are packed along the lane axis so the last dim is a
    multiple of 128 (unmasked full-width stores) while keeping the cross-lane fold /
    jnp.tile replication as small as possible.
    """
    if C % 128 == 0:
        return 1
    r = 128 // math.gcd(C, 128)
    if L % r == 0:
        return r
    # Fallback: widest pack that still divides L without exceeding one vreg row.
    best = 1
    for cand in range(1, min(L, max(1, 128 // C)) + 1):
        if L % cand == 0:
            best = cand
    return best


def _pick_tiles(B, Lg, W, in_itemsize, out_itemsize, target, prefer_full_l):
    """Pick (TB, TL) block dims (both exact divisors).

    Priorities: (1) fit the per-step block budget, (2) >= 2 steps on the parallel
    batch axis (both v7x TCs), (3) for norm keep the whole L resident (single HBM
    read, fused stats), (4) enough total steps to hide DMA, (5) fattest block.
    Byte accounting: true in/out dtypes, 2x double buffering, f32 temp for bf16 I/O.
    """

    def block_bytes(tb, tl):
        n = tb * tl * W
        dbl = 2 * n * (in_itemsize + out_itemsize)                  # dbl-buffered in + out
        tmp = n * 4 if max(in_itemsize, out_itemsize) < 4 else 0    # in-kernel f32 temp
        return dbl + tmp

    l_divs = [d for d in range(1, Lg + 1) if Lg % d == 0 and (d % 8 == 0 or d == Lg)]
    b_divs = [d for d in range(1, B + 1) if B % d == 0]
    best, best_key = (1, min(l_divs)), None
    for tb in b_divs:
        for tl in l_divs:
            bb = block_bytes(tb, tl)
            nb, nl = B // tb, Lg // tl
            key = (
                bb <= target,                           # fits the per-step block budget
                min(nb, 2),                             # >= 2 parallel steps (v7x 2 TCs)
                bool(tl == Lg) if prefer_full_l else 0,  # norm: single-HBM-read fused path
                min(nb * nl, 4),                        # enough steps to hide DMA
                bb if bb <= target else -bb,            # then fatten / least overshoot
            )
            if best_key is None or key > best_key:
                best, best_key = (tb, tl), key
    return best


# -------------------------------------------------------------------------- kernels

def _fma_store(y_ref, x_ref, scale_l, shift_l):
    """Single fused elementwise pass y = x*scale + shift (2 VPU ops/elem, no divides).

    For bf16 I/O the big pass stays in bf16 (half the vreg traffic on v6e/v7x bf16
    VALUs; v5e widens internally but stays correct).  No full-tile f32 temp is bound.
    """
    if jnp.dtype(y_ref.dtype) == jnp.dtype(jnp.bfloat16):
        y_ref[...] = (x_ref[...] * scale_l.astype(jnp.bfloat16)
                      + shift_l.astype(jnp.bfloat16))
    else:
        y_ref[...] = (x_ref[...].astype(jnp.float32) * scale_l + shift_l).astype(y_ref.dtype)


def _make_norm_fused_kernel(L, C, r, eps, affine):
    """Whole (TB, Lg, W) slab resident: x read from HBM once, two-pass variance in VMEM."""
    inv_L = 1.0 / float(L)
    W = r * C

    def kernel(x_ref, w_ref, b_ref, y_ref, stats_ref):
        TB = x_ref.shape[0]
        # Pass 1 (VMEM): per-channel mean, f32 accumulation, cast streamed inline.
        s1 = jnp.sum(x_ref[...].astype(jnp.float32), axis=1)              # (TB, W)
        mean = jnp.sum(s1.reshape(TB, r, C), axis=1) * inv_L              # (TB, C)
        mean_l = jnp.tile(mean, (1, r)).reshape(TB, 1, W)
        # Pass 2 (VMEM): centered second moment -> true two-pass variance.  The tile
        # is VMEM-resident and the kernel is HBM-bound, so this sweep is free
        # wall-clock and avoids E[x^2]-E[x]^2 cancellation for large-mean series.
        d2 = jnp.sum((x_ref[...].astype(jnp.float32) - mean_l) ** 2, axis=1)  # (TB, W)
        var = jnp.sum(d2.reshape(TB, r, C), axis=1) * inv_L               # (TB, C)
        stdev = jnp.sqrt(var + eps)
        inv_std = lax.rsqrt(var + eps)                 # per-channel only (EUP slot)
        if affine:
            scale = w_ref[...] * inv_std               # (TB, C)
            shift = b_ref[...] - mean * scale
        else:
            scale = inv_std
            shift = -mean * inv_std
        # Lane p of the packed layout carries channel p % C.
        scale_l = jnp.tile(scale, (1, r)).reshape(TB, 1, W)
        shift_l = jnp.tile(shift, (1, r)).reshape(TB, 1, W)
        _fma_store(y_ref, x_ref, scale_l, shift_l)
        stats_ref[:, 0:1, :] = mean.reshape(TB, 1, C)
        stats_ref[:, 1:2, :] = stdev.reshape(TB, 1, C)

    return kernel


def _make_stats_kernel(L, C, r, eps):
    """L-tiled stats (pattern P3): VMEM accumulators, shifted one-pass moments."""
    inv_L = 1.0 / float(L)
    W = r * C

    def kernel(x_ref, stats_ref, s1_ref, s2_ref, x0_ref):
        TB = x_ref.shape[0]
        l = pl.program_id(1)

        @pl.when(l == 0)
        def _():
            s1_ref[...] = jnp.zeros_like(s1_ref)
            s2_ref[...] = jnp.zeros_like(s2_ref)
            # Shift value = first time step per (batch, channel): removes the level
            # offset so the streamed accumulation does not cancel catastrophically.
            row0 = x_ref[:, 0:1, :].astype(jnp.float32)                    # (TB, 1, W)
            x0_ref[...] = row0[:, 0, 0:C]                                  # (TB, C)

        x0_l = jnp.tile(x0_ref[...], (1, r)).reshape(TB, 1, W)
        d1 = jnp.sum(x_ref[...].astype(jnp.float32) - x0_l, axis=1)            # (TB, W)
        d2 = jnp.sum((x_ref[...].astype(jnp.float32) - x0_l) ** 2, axis=1)     # (TB, W)
        s1_ref[...] += jnp.sum(d1.reshape(TB, r, C), axis=1)
        s2_ref[...] += jnp.sum(d2.reshape(TB, r, C), axis=1)

        @pl.when(l == pl.num_programs(1) - 1)
        def _():
            m1 = s1_ref[...] * inv_L
            mean = x0_ref[...] + m1
            var = jnp.maximum(s2_ref[...] * inv_L - m1 * m1, 0.0)
            stdev = jnp.sqrt(var + eps)
            stats_ref[:, 0:1, :] = mean.reshape(TB, 1, C)
            stats_ref[:, 1:2, :] = stdev.reshape(TB, 1, C)

    return kernel


def _make_apply_norm_kernel(C, r, affine):
    """Elementwise normalize+affine from precomputed stats (L-tiled apply pass)."""

    def kernel(x_ref, stats_ref, w_ref, b_ref, y_ref):
        mean = stats_ref[:, 0:1, :]                    # (TB, 1, C) f32
        stdev = stats_ref[:, 1:2, :]
        inv_std = pl.reciprocal(stdev)                 # tiny per-channel vector
        if affine:
            scale = w_ref[...].reshape(1, 1, C) * inv_std
            shift = b_ref[...].reshape(1, 1, C) - mean * scale
        else:
            scale = inv_std
            shift = -mean * inv_std
        scale_l = jnp.tile(scale, (1, 1, r))
        shift_l = jnp.tile(shift, (1, 1, r))
        _fma_store(y_ref, x_ref, scale_l, shift_l)

    return kernel


def _make_denorm_kernel(C, r, eps, affine):
    def kernel(x_ref, mean_ref, stdev_ref, w_ref, b_ref, y_ref):
        mean = mean_ref[...].astype(jnp.float32)       # (TB, 1, C)
        stdev = stdev_ref[...].astype(jnp.float32)
        if affine:
            inv_w = pl.reciprocal(w_ref[...].reshape(1, 1, C) + eps * eps)   # hoisted, (1,1,C)
            scale = stdev * inv_w
            shift = mean - b_ref[...].reshape(1, 1, C) * scale
        else:
            scale, shift = stdev, mean
        scale_l = jnp.tile(scale, (1, 1, r))
        shift_l = jnp.tile(shift, (1, 1, r))
        _fma_store(y_ref, x_ref, scale_l, shift_l)

    return kernel


# -------------------------------------------------------------------------- wrappers

@partial(jax.jit, static_argnames=("eps", "affine", "block_bytes_target"))
def revin_norm(x, weight, bias, *, eps=EPS, affine=AFFINE, block_bytes_target=None):
    """x: (B, L, C); weight/bias: (C,). Returns (y, mean, stdev); mean/stdev are (B,1,C) f32."""
    B, L, C = x.shape
    r = _pick_lane_pack(L, C)
    Lg, W = L // r, r * C
    target, vmem_limit = _budgets(block_bytes_target)
    tb, tl = _pick_tiles(B, Lg, W, x.dtype.itemsize, x.dtype.itemsize, target,
                         prefer_full_l=True)
    nb, nl = B // tb, Lg // tl
    # Lane-dense packing (row-major regroup).  TODO(synk): if the compiled HLO shows a
    # relayout copy around this reshape for your C, make (B, Lg, r*C) the canonical
    # layout of x in the surrounding model (or force r = 1).
    xr = x.reshape(B, Lg, W)
    w2 = weight.reshape(1, C).astype(jnp.float32)
    b2 = bias.reshape(1, C).astype(jnp.float32)

    if nl == 1:
        # Fused path: x read from HBM once, two-pass variance on the resident tile.
        y_r, stats = pl.pallas_call(
            _make_norm_fused_kernel(L, C, r, eps, affine),
            out_shape=(jax.ShapeDtypeStruct((B, Lg, W), x.dtype),
                       jax.ShapeDtypeStruct((B, 2, C), jnp.float32)),
            grid_spec=pltpu.PrefetchScalarGridSpec(
                num_scalar_prefetch=0,
                grid=(nb,),
                in_specs=[pl.BlockSpec((tb, Lg, W), lambda b: (b, 0, 0)),
                          pl.BlockSpec((1, C), lambda b: (0, 0)),
                          pl.BlockSpec((1, C), lambda b: (0, 0))],
                out_specs=[pl.BlockSpec((tb, Lg, W), lambda b: (b, 0, 0)),
                           pl.BlockSpec((tb, 2, C), lambda b: (b, 0, 0))],
            ),
            compiler_params=pltpu.CompilerParams(
                dimension_semantics=("parallel",),
                vmem_limit_bytes=vmem_limit),
        )(xr, w2, b2)
    else:
        # Long-sequence path: stats kernel (L axis "arbitrary", VMEM accumulators)
        # followed by an elementwise apply kernel tiled over (B, L).
        stats = pl.pallas_call(
            _make_stats_kernel(L, C, r, eps),
            out_shape=jax.ShapeDtypeStruct((B, 2, C), jnp.float32),
            grid_spec=pltpu.PrefetchScalarGridSpec(
                num_scalar_prefetch=0,
                grid=(nb, nl),
                in_specs=[pl.BlockSpec((tb, tl, W), lambda b, l: (b, l, 0))],
                out_specs=pl.BlockSpec((tb, 2, C), lambda b, l: (b, 0, 0)),
                scratch_shapes=[pltpu.VMEM((tb, C), jnp.float32),
                                pltpu.VMEM((tb, C), jnp.float32),
                                pltpu.VMEM((tb, C), jnp.float32)],
            ),
            compiler_params=pltpu.CompilerParams(
                dimension_semantics=("parallel", "arbitrary"),
                vmem_limit_bytes=vmem_limit),
        )(xr)
        y_r = pl.pallas_call(
            _make_apply_norm_kernel(C, r, affine),
            out_shape=jax.ShapeDtypeStruct((B, Lg, W), x.dtype),
            grid_spec=pltpu.PrefetchScalarGridSpec(
                num_scalar_prefetch=0,
                grid=(nb, nl),
                in_specs=[pl.BlockSpec((tb, tl, W), lambda b, l: (b, l, 0)),
                          pl.BlockSpec((tb, 2, C), lambda b, l: (b, 0, 0)),
                          pl.BlockSpec((1, C), lambda b, l: (0, 0)),
                          pl.BlockSpec((1, C), lambda b, l: (0, 0))],
                out_specs=pl.BlockSpec((tb, tl, W), lambda b, l: (b, l, 0)),
            ),
            compiler_params=pltpu.CompilerParams(
                dimension_semantics=("parallel", "parallel"),
                vmem_limit_bytes=vmem_limit),
        )(xr, stats, w2, b2)

    y = y_r.reshape(B, L, C)
    return y, stats[:, 0:1, :], stats[:, 1:2, :]


@partial(jax.jit, static_argnames=("eps", "affine", "block_bytes_target"))
def revin_denorm(x, mean, stdev, weight, bias, *, eps=EPS, affine=AFFINE,
                 block_bytes_target=None):
    """x: (B, L, C); mean/stdev: (B, 1, C); weight/bias: (C,)."""
    B, L, C = x.shape
    r = _pick_lane_pack(L, C)
    Lg, W = L // r, r * C
    target, vmem_limit = _budgets(block_bytes_target)
    tb, tl = _pick_tiles(B, Lg, W, x.dtype.itemsize, x.dtype.itemsize, target,
                         prefer_full_l=False)
    nb, nl = B // tb, Lg // tl
    xr = x.reshape(B, Lg, W)
    mean = mean.reshape(B, 1, C).astype(jnp.float32)
    stdev = stdev.reshape(B, 1, C).astype(jnp.float32)
    w2 = weight.reshape(1, C).astype(jnp.float32)
    b2 = bias.reshape(1, C).astype(jnp.float32)
    y_r = pl.pallas_call(
        _make_denorm_kernel(C, r, eps, affine),
        out_shape=jax.ShapeDtypeStruct((B, Lg, W), x.dtype),
        grid_spec=pltpu.PrefetchScalarGridSpec(
            num_scalar_prefetch=0,
            grid=(nb, nl),
            in_specs=[pl.BlockSpec((tb, tl, W), lambda b, l: (b, l, 0)),
                      pl.BlockSpec((tb, 1, C), lambda b, l: (b, 0, 0)),
                      pl.BlockSpec((tb, 1, C), lambda b, l: (b, 0, 0)),
                      pl.BlockSpec((1, C), lambda b, l: (0, 0)),
                      pl.BlockSpec((1, C), lambda b, l: (0, 0))],
            out_specs=pl.BlockSpec((tb, tl, W), lambda b, l: (b, l, 0)),
        ),
        compiler_params=pltpu.CompilerParams(
            dimension_semantics=("parallel", "parallel"),
            vmem_limit_bytes=vmem_limit),
    )(xr, mean, stdev, w2, b2)
    return y_r.reshape(B, L, C)


# ------------------------------------------------------------------------- references

def _reference_norm(x, weight, bias, eps=EPS):
    mean = jnp.mean(x, axis=1, keepdims=True)
    var = jnp.mean((x - mean) ** 2, axis=1, keepdims=True)   # unbiased=False
    stdev = jnp.sqrt(var + eps)
    y = (x - mean) / stdev
    y = y * weight + bias
    return y, mean, stdev


def _reference_denorm(x, mean, stdev, weight, bias, eps=EPS):
    x = x - bias
    x = x / (weight + eps * eps)
    x = x * stdev
    x = x + mean
    return x


if __name__ == "__main__":
    key = jax.random.PRNGKey(0)
    B, L, C = 2, 16, 8          # batch, sequence length, num_features
    kx, kw, kb, kx2 = jax.random.split(key, 4)
    x = jax.random.normal(kx, (B, L, C), dtype=jnp.float32) * 3.0 + 1.5

    # Module init (nn.Parameter(ones) / nn.Parameter(zeros)) ...
    w_init = jnp.ones((C,), dtype=jnp.float32)
    b_init = jnp.zeros((C,), dtype=jnp.float32)
    # ... plus a non-trivial affine set to exercise the fused scale/shift path.
    w_rand = 0.5 + jax.random.uniform(kw, (C,), dtype=jnp.float32)
    b_rand = 0.1 * jax.random.normal(kb, (C,), dtype=jnp.float32)

    for w, b in ((w_init, b_init), (w_rand, b_rand)):
        # --- norm mode (fused path: whole L resident) ---
        y, mean, stdev = revin_norm(x, w, b)
        jax.block_until_ready(y)
        y_ref, mean_ref, stdev_ref = _reference_norm(x, w, b)
        assert jnp.allclose(y, y_ref, atol=1e-4, rtol=1e-4)
        assert jnp.allclose(mean, mean_ref, atol=1e-4, rtol=1e-4)
        assert jnp.allclose(stdev, stdev_ref, atol=1e-4, rtol=1e-4)

        # --- denorm mode (round trip recovers the input) ---
        x_rec = revin_denorm(y, mean, stdev, w, b)
        jax.block_until_ready(x_rec)
        x_rec_ref = _reference_denorm(y_ref, mean_ref, stdev_ref, w, b)
        assert jnp.allclose(x_rec, x_rec_ref, atol=1e-4, rtol=1e-4)
        assert jnp.allclose(x_rec, x, atol=1e-3, rtol=1e-3)

    # --- long-sequence / small-budget case: forces the L-tiled stats + apply split path ---
    L2 = 256
    x2 = jax.random.normal(kx2, (B, L2, C), dtype=jnp.float32) * 2.0 + 10.0  # large mean
    y2, mean2, stdev2 = revin_norm(x2, w_rand, b_rand, block_bytes_target=20 * 1024)
    jax.block_until_ready(y2)
    y2_ref, mean2_ref, stdev2_ref = _reference_norm(x2, w_rand, b_rand)
    assert jnp.allclose(y2, y2_ref, atol=1e-4, rtol=1e-4)
    assert jnp.allclose(mean2, mean2_ref, atol=1e-4, rtol=1e-4)
    assert jnp.allclose(stdev2, stdev2_ref, atol=1e-4, rtol=1e-4)
    x2_rec = revin_denorm(y2, mean2, stdev2, w_rand, b_rand, block_bytes_target=20 * 1024)
    jax.block_until_ready(x2_rec)
    assert jnp.allclose(x2_rec, x2, atol=1e-3, rtol=1e-3)

    # --- bf16 I/O: stats stay f32, the big elementwise pass runs in bf16 ---
    x_bf = x.astype(jnp.bfloat16)
    y_bf, mean_bf, stdev_bf = revin_norm(x_bf, w_rand, b_rand)
    jax.block_until_ready(y_bf)
    y_bref, m_bref, s_bref = _reference_norm(x_bf.astype(jnp.float32), w_rand, b_rand)
    assert jnp.allclose(mean_bf, m_bref, atol=1e-3, rtol=1e-3)
    assert jnp.allclose(stdev_bf, s_bref, atol=1e-3, rtol=1e-3)
    assert jnp.allclose(y_bf.astype(jnp.float32), y_bref, atol=0.15, rtol=0.05)
    x_bf_rec = revin_denorm(y_bf, mean_bf, stdev_bf, w_rand, b_rand)
    jax.block_until_ready(x_bf_rec)
    assert jnp.allclose(x_bf_rec.astype(jnp.float32), x_bf.astype(jnp.float32),
                        atol=0.3, rtol=0.05)

    print("KERNEL_OK")
</pallas_src>

<mosaic_0001>
module attributes {stable_mosaic.version = 11 : i64} {
  func.func @kernel(%arg0: i32, %arg1: memref<1x1x128xf32, #tpu.memory_space<vmem>>, %arg2: memref<1x8xf32, #tpu.memory_space<vmem>>, %arg3: memref<1x8xf32, #tpu.memory_space<vmem>>, %arg4: memref<1x1x128xf32, #tpu.memory_space<vmem>>, %arg5: memref<1x2x8xf32, #tpu.memory_space<vmem>>) attributes {dimension_semantics = [#tpu.dimension_semantics<parallel>], iteration_bounds = array<i64: 2>, scalar_prefetch = 0 : i64, scratch_operands = 0 : i64, tpu.core_type = #tpu.core_type<tc>, window_params = [{transform_indices = @transform_0, window_bounds = array<i64: 1, 1, 128>}, {pipeline_mode = #tpu.pipeline_mode<synchronous>, transform_indices = @transform_1, window_bounds = array<i64: 1, 8>}, {pipeline_mode = #tpu.pipeline_mode<synchronous>, transform_indices = @transform_2, window_bounds = array<i64: 1, 8>}, {transform_indices = @transform_3, window_bounds = array<i64: 1, 1, 128>}, {transform_indices = @transform_4, window_bounds = array<i64: 1, 2, 8>}]} {
    %c0 = arith.constant 0 : index
    %c0_0 = arith.constant 0 : index
    %c0_1 = arith.constant 0 : index
    %0 = vector.load %arg1[%c0, %c0_0, %c0_1] : memref<1x1x128xf32, #tpu.memory_space<vmem>>, vector<1x1x128xf32>
    %cst = arith.constant dense<0.000000e+00> : vector<1x128xf32>
    %1 = vector.multi_reduction <add>, %0, %cst [1] : vector<1x1x128xf32> to vector<1x128xf32>
    %2 = vector.shape_cast %1 : vector<1x128xf32> to vector<1x16x8xf32>
    %cst_2 = arith.constant dense<0.000000e+00> : vector<1x8xf32>
    %3 = vector.multi_reduction <add>, %2, %cst_2 [1] : vector<1x16x8xf32> to vector<1x8xf32>
    %cst_3 = arith.constant 6.250000e-02 : f32
    %4 = vector.broadcast %cst_3 : f32 to vector<1x8xf32>
    %5 = arith.mulf %3, %4 : vector<1x8xf32>
    %6 = tpu.concatenate %5, %5, %5, %5, %5, %5, %5, %5, %5, %5, %5, %5, %5, %5, %5, %5 in 1 : vector<1x8xf32>, vector<1x8xf32>, vector<1x8xf32>, vector<1x8xf32>, vector<1x8xf32>, vector<1x8xf32>, vector<1x8xf32>, vector<1x8xf32>, vector<1x8xf32>, vector<1x8xf32>, vector<1x8xf32>, vector<1x8xf32>, vector<1x8xf32>, vector<1x8xf32>, vector<1x8xf32>, vector<1x8xf32> -> vector<1x128xf32>
    %7 = vector.shape_cast %6 : vector<1x128xf32> to vector<1x1x128xf32>
    %c0_4 = arith.constant 0 : index
    %c0_5 = arith.constant 0 : index
    %c0_6 = arith.constant 0 : index
    %8 = vector.load %arg1[%c0_4, %c0_5, %c0_6] : memref<1x1x128xf32, #tpu.memory_space<vmem>>, vector<1x1x128xf32>
    %9 = arith.subf %8, %7 : vector<1x1x128xf32>
    %10 = arith.mulf %9, %9 : vector<1x1x128xf32>
    %cst_7 = arith.constant dense<0.000000e+00> : vector<1x128xf32>
    %11 = vector.multi_reduction <add>, %10, %cst_7 [1] : vector<1x1x128xf32> to vector<1x128xf32>
    %12 = vector.shape_cast %11 : vector<1x128xf32> to vector<1x16x8xf32>
    %cst_8 = arith.constant dense<0.000000e+00> : vector<1x8xf32>
    %13 = vector.multi_reduction <add>, %12, %cst_8 [1] : vector<1x16x8xf32> to vector<1x8xf32>
    %cst_9 = arith.constant 6.250000e-02 : f32
    %14 = vector.broadcast %cst_9 : f32 to vector<1x8xf32>
    %15 = arith.mulf %13, %14 : vector<1x8xf32>
    %cst_10 = arith.constant 9.99999974E-6 : f32
    %16 = vector.broadcast %cst_10 : f32 to vector<1x8xf32>
    %17 = arith.addf %15, %16 : vector<1x8xf32>
    %18 = math.sqrt %17 : vector<1x8xf32>
    %cst_11 = arith.constant 9.99999974E-6 : f32
    %19 = vector.broadcast %cst_11 : f32 to vector<1x8xf32>
    %20 = arith.addf %15, %19 : vector<1x8xf32>
    %21 = math.rsqrt %20 : vector<1x8xf32>
    %c0_12 = arith.constant 0 : index
    %c0_13 = arith.constant 0 : index
    %22 = vector.load %arg2[%c0_12, %c0_13] : memref<1x8xf32, #tpu.memory_space<vmem>>, vector<1x8xf32>
    %23 = arith.mulf %22, %21 : vector<1x8xf32>
    %c0_14 = arith.constant 0 : index
    %c0_15 = arith.constant 0 : index
    %24 = vector.load %arg3[%c0_14, %c0_15] : memref<1x8xf32, #tpu.memory_space<vmem>>, vector<1x8xf32>
    %25 = arith.mulf %5, %23 : vector<1x8xf32>
    %26 = arith.subf %24, %25 : vector<1x8xf32>
    %27 = tpu.concatenate %23, %23, %23, %23, %23, %23, %23, %23, %23, %23, %23, %23, %23, %23, %23, %23 in 1 : vector<1x8xf32>, vector<1x8xf32>, vector<1x8xf32>, vector<1x8xf32>, vector<1x8xf32>, vector<1x8xf32>, vector<1x8xf32>, vector<1x8xf32>, vector<1x8xf32>, vector<1x8xf32>, vector<1x8xf32>, vector<1x8xf32>, vector<1x8xf32>, vector<1x8xf32>, vector<1x8xf32>, vector<1x8xf32> -> vector<1x128xf32>
    %28 = vector.shape_cast %27 : vector<1x128xf32> to vector<1x1x128xf32>
    %29 = tpu.concatenate %26, %26, %26, %26, %26, %26, %26, %26, %26, %26, %26, %26, %26, %26, %26, %26 in 1 : vector<1x8xf32>, vector<1x8xf32>, vector<1x8xf32>, vector<1x8xf32>, vector<1x8xf32>, vector<1x8xf32>, vector<1x8xf32>, vector<1x8xf32>, vector<1x8xf32>, vector<1x8xf32>, vector<1x8xf32>, vector<1x8xf32>, vector<1x8xf32>, vector<1x8xf32>, vector<1x8xf32>, vector<1x8xf32> -> vector<1x128xf32>
    %30 = vector.shape_cast %29 : vector<1x128xf32> to vector<1x1x128xf32>
    %c0_16 = arith.constant 0 : index
    %c0_17 = arith.constant 0 : index
    %c0_18 = arith.constant 0 : index
    %31 = vector.load %arg1[%c0_16, %c0_17, %c0_18] : memref<1x1x128xf32, #tpu.memory_space<vmem>>, vector<1x1x128xf32>
    %32 = arith.mulf %31, %28 : vector<1x1x128xf32>
    %33 = arith.addf %32, %30 : vector<1x1x128xf32>
    %c0_19 = arith.constant 0 : index
    %c0_20 = arith.constant 0 : index
    %c0_21 = arith.constant 0 : index
    %34 = vector.load %arg4[%c0_19, %c0_20, %c0_21] : memref<1x1x128xf32, #tpu.memory_space<vmem>>, vector<1x1x128xf32>
    tpu.vector_store %arg4[%c0_19, %c0_20, %c0_21], %33 {strides = array<i32>} : memref<1x1x128xf32, #tpu.memory_space<vmem>>, vector<1x1x128xf32>,
    %35 = vector.shape_cast %5 : vector<1x8xf32> to vector<1x1x8xf32>
    %c0_22 = arith.constant 0 : index
    %c0_23 = arith.constant 0 : index
    %c0_24 = arith.constant 0 : index
    %36 = vector.load %arg5[%c0_22, %c0_23, %c0_24] : memref<1x2x8xf32, #tpu.memory_space<vmem>>, vector<1x1x8xf32>
    tpu.vector_store %arg5[%c0_22, %c0_23, %c0_24], %35 {strides = array<i32>} : memref<1x2x8xf32, #tpu.memory_space<vmem>>, vector<1x1x8xf32>,
    %37 = vector.shape_cast %18 : vector<1x8xf32> to vector<1x1x8xf32>
    %c0_25 = arith.constant 0 : index
    %c1 = arith.constant 1 : index
    %c0_26 = arith.constant 0 : index
    %38 = vector.load %arg5[%c0_25, %c1, %c0_26] : memref<1x2x8xf32, #tpu.memory_space<vmem>>, vector<1x1x8xf32>
    tpu.vector_store %arg5[%c0_25, %c1, %c0_26], %37 {strides = array<i32>} : memref<1x2x8xf32, #tpu.memory_space<vmem>>, vector<1x1x8xf32>,
    return
  }
  func.func @transform_0(%arg0: i32) -> (i32, i32, i32) {
    %c0_i32 = arith.constant 0 : i32
    %c0_i32_0 = arith.constant 0 : i32
    %c0_i32_1 = arith.constant 0 : i32
    return %arg0, %c0_i32, %c0_i32_0 : i32, i32, i32
  }
  func.func @transform_1(%arg0: i32) -> (i32, i32) {
    %c0_i32 = arith.constant 0 : i32
    %c0_i32_0 = arith.constant 0 : i32
    %c0_i32_1 = arith.constant 0 : i32
    return %c0_i32, %c0_i32_0 : i32, i32
  }
  func.func @transform_2(%arg0: i32) -> (i32, i32) {
    %c0_i32 = arith.constant 0 : i32
    %c0_i32_0 = arith.constant 0 : i32
    %c0_i32_1 = arith.constant 0 : i32
    return %c0_i32, %c0_i32_0 : i32, i32
  }
  func.func @transform_3(%arg0: i32) -> (i32, i32, i32) {
    %c0_i32 = arith.constant 0 : i32
    %c0_i32_0 = arith.constant 0 : i32
    %c0_i32_1 = arith.constant 0 : i32
    return %arg0, %c0_i32, %c0_i32_0 : i32, i32, i32
  }
  func.func @transform_4(%arg0: i32) -> (i32, i32, i32) {
    %c0_i32 = arith.constant 0 : i32
    %c0_i32_0 = arith.constant 0 : i32
    %c0_i32_1 = arith.constant 0 : i32
    return %arg0, %c0_i32, %c0_i32_0 : i32, i32, i32
  }
}

</mosaic_0001>

<llo_original>
// kernel: revin_norm.1
$region0: #{revin_norm.1}
  #allocation0 [shape = 'u32[]', space=smem, size = 0x4, offset = 0x4, fixed_abs, tag = 'smem constant byte address 0x4 - core index']
  #allocation1 [shape = 'u32[144,128]{1,0:T(1,128)}', space=vmem, size = 0x12000, scoped, tag = 'internal scratch']
  %s0 = inlined_call_operand.vmem [shape: f32[2,1,128], index: 0, kind: input, shape index: {}]
  %s1 = inlined_call_operand.vmem [shape: f32[1,8], index: 1, kind: input, shape index: {}]
  %s2 = inlined_call_operand.vmem [shape: f32[1,8], index: 2, kind: input, shape index: {}]
  %s3 = inlined_call_operand.vmem [shape: f32[2,1,128], index: 3, kind: output, shape index: {0}]
  %s4 = inlined_call_operand.vmem [shape: f32[2,2,8], index: 4, kind: output, shape index: {1}]
  %5 = xla_tuple %s3, %s4
  %s6 = sld [smem:[#allocation0]]
  $region53: #{revin_norm.1} parent=0
    _
  %s8 = ssub.s32 1, %s6
  %s9 = scalar_select 0, %s8, %s6
  loop: start=0, step=1, limit=4
  $region2: #{revin_norm.1} parent=0 // loop_pre_header
    _
  $region3: #{revin_norm.1} parent=0 // loop_header
    %s11 = sphi 0, %s15
    %p12 = scmp.ge.s32.totalorder %s11, 4
    %s21 = sphi 0, %s23
    %s24 = sphi 0, %s21
    %s25 = sphi 0, %s24
    %s41 = sphi 0, %s25
    %s45 = sphi 0, %s45
    %s47 = sphi 0, %s45
    %s48 = sphi 0, %s47
    %s62 = sphi 0, %s48
    %s66 = sphi 0, %s66
    %s68 = sphi 0, %s66
    %s69 = sphi 0, %s68
    %s83 = sphi 0, %s69
    %s89 = sphi 0, %s91
    %s92 = sphi 0, %s89
    %s93 = sphi 0, %s92
    %s109 = sphi 0, %s93
    %s115 = sphi 0, %s117
    %s118 = sphi 0, %s115
    %s119 = sphi 0, %s118
    %s135 = sphi 0, %s119
  $region4: #{revin_norm.1} parent=0 // loop_header_branch
    %14 = sbr.rel (%p12) target = $region8
  $region5: #{revin_norm.1} parent=0 // loop_body
    %s16 = ssub.s32 %s11, 1
    %s17 = ssub.s32 %s11, 2
    %s18 = sadd.s32 %s11, 1
    %s19 = ssub.s32 %s11, %s18
    %p20 = scmp.eq.s32.totalorder %s19, 0
    %s22 = sadd.s32 %s21, 1
    %s23 = scalar_select %p20, %s21, %s22
    %p26 = pneg %p20
    %p27 = scmp.eq.s32.totalorder %s11, 1
    %p28 = por %p26, %p27
    %p29 = scmp.ne.s32.totalorder %s21, %s24
    %p30 = scmp.eq.s32.totalorder %s11, 0
    %p31 = por %p29, %p30
    %p32 = scmp.ne.s32.totalorder %s21, %s24
    %p33 = scmp.eq.s32.totalorder %s16, 1
    %p34 = por %p32, %p33
    %p35 = scmp.ne.s32.totalorder %s24, %s25
    %p36 = scmp.eq.s32.totalorder %s16, 0
    %p37 = por %p35, %p36
    %p38 = scmp.ne.s32.totalorder %s24, %s25
    %p39 = scmp.eq.s32.totalorder %s17, 1
    %p40 = por %p38, %p39
    %p42 = scmp.ne.s32.totalorder %s25, %s41
    %p43 = scmp.eq.s32.totalorder %s17, 0
    %p44 = por %p42, %p43
    %s46 = sadd.s32 %s45, 1
    %p49 = scmp.eq.s32.totalorder %s11, 1
    %p50 = scmp.ne.s32.totalorder %s45, %s47
    %p51 = scmp.eq.s32.totalorder %s11, 0
    %p52 = por %p50, %p51
    %p53 = scmp.ne.s32.totalorder %s45, %s47
    %p54 = scmp.eq.s32.totalorder %s16, 1
    %p55 = por %p53, %p54
    %p56 = scmp.ne.s32.totalorder %s47, %s48
    %p57 = scmp.eq.s32.totalorder %s16, 0
    %p58 = por %p56, %p57
    %p59 = scmp.ne.s32.totalorder %s47, %s48
    %p60 = scmp.eq.s32.totalorder %s17, 1
    %p61 = por %p59, %p60
    %p63 = scmp.ne.s32.totalorder %s48, %s62
    %p64 = scmp.eq.s32.totalorder %s17, 0
    %p65 = por %p63, %p64
    %s67 = sadd.s32 %s66, 1
    %p70 = scmp.eq.s32.totalorder %s11, 1
    %p71 = scmp.ne.s32.totalorder %s66, %s68
    %p72 = scmp.eq.s32.totalorder %s11, 0
    %p73 = por %p71, %p72
    %p74 = scmp.ne.s32.totalorder %s66, %s68
    %p75 = scmp.eq.s32.totalorder %s16, 1
    %p76 = por %p74, %p75
    %p77 = scmp.ne.s32.totalorder %s68, %s69
    %p78 = scmp.eq.s32.totalorder %s16, 0
    %p79 = por %p77, %p78
    %p80 = scmp.ne.s32.totalorder %s68, %s69
    %p81 = scmp.eq.s32.totalorder %s17, 1
    %p82 = por %p80, %p81
    %p84 = scmp.ne.s32.totalorder %s69, %s83
    %p85 = scmp.eq.s32.totalorder %s17, 0
    %p86 = por %p84, %p85
    %s87 = ssub.s32 %s11, %s18
    %p88 = scmp.eq.s32.totalorder %s87, 0
    %s90 = sadd.s32 %s89, 1
    %s91 = scalar_select %p88, %s89, %s90
    %p94 = pneg %p88
    %p95 = scmp.eq.s32.totalorder %s11, 1
    %p96 = por %p94, %p95
    %p97 = scmp.ne.s32.totalorder %s89, %s92
    %p98 = scmp.eq.s32.totalorder %s11, 0
    %p99 = por %p97, %p98
    %p100 = scmp.ne.s32.totalorder %s89, %s92
    %p101 = scmp.eq.s32.totalorder %s16, 1
    %p102 = por %p100, %p101
    %p103 = scmp.ne.s32.totalorder %s92, %s93
    %p104 = scmp.eq.s32.totalorder %s16, 0
    %p105 = por %p103, %p104
    %p106 = scmp.ne.s32.totalorder %s92, %s93
    %p107 = scmp.eq.s32.totalorder %s17, 1
    %p108 = por %p106, %p107
    %p110 = scmp.ne.s32.totalorder %s93, %s109
    %p111 = scmp.eq.s32.totalorder %s17, 0
    %p112 = por %p110, %p111
    %s113 = ssub.s32 %s11, %s18
    %p114 = scmp.eq.s32.totalorder %s113, 0
    %s116 = sadd.s32 %s115, 1
    %s117 = scalar_select %p114, %s115, %s116
    %p120 = pneg %p114
    %p121 = scmp.eq.s32.totalorder %s11, 1
    %p122 = por %p120, %p121
    %p123 = scmp.ne.s32.totalorder %s115, %s118
    %p124 = scmp.eq.s32.totalorder %s11, 0
    %p125 = por %p123, %p124
    %p126 = scmp.ne.s32.totalorder %s115, %s118
    %p127 = scmp.eq.s32.totalorder %s16, 1
    %p128 = por %p126, %p127
    %p129 = scmp.ne.s32.totalorder %s118, %s119
    %p130 = scmp.eq.s32.totalorder %s16, 0
    %p131 = por %p129, %p130
    %p132 = scmp.ne.s32.totalorder %s118, %s119
    %p133 = scmp.eq.s32.totalorder %s17, 1
    %p134 = por %p132, %p133
    %p136 = scmp.ne.s32.totalorder %s119, %s135
    %p137 = scmp.eq.s32.totalorder %s17, 0
    %p138 = por %p136, %p137
    %p139 = scmp.le.s32.totalorder 1, %s11
    %p140 = scmp.lt.s32.totalorder %s11, 3
    %p141 = pnand %p139, %p140
    %p142 = pneg %p141
    // Predicated region
    $region9: #{revin_norm.1} parent=5 // pred_check
      _
    $region10: #{revin_norm.1} parent=5 // pred_check_branch
      %144 = sbr.rel (%p141) target = $region12
    $region11: #{revin_norm.1} parent=5 // pred_region
      %s145 = ssub.s32 %s11, 1
      // Predicated region
      $region13: #{revin_norm.1} parent=11 // pred_check
        %p146 = pneg %p58
      $region14: #{revin_norm.1} parent=11 // pred_check_branch
        %148 = sbr.rel (%p146) target = $region16
      $region15: #{revin_norm.1} parent=11 // pred_region
        _
      $region16: #{revin_norm.1} parent=11 // pred_fallthru
        _
      // Predicated region
      $region17: #{revin_norm.1} parent=11 // pred_check
        %p149 = pneg %p79
      $region18: #{revin_norm.1} parent=11 // pred_check_branch
        %151 = sbr.rel (%p149) target = $region20
      $region19: #{revin_norm.1} parent=11 // pred_region
        _
      $region20: #{revin_norm.1} parent=11 // pred_fallthru
        _
    $region12: #{revin_norm.1} parent=5 // pred_fallthru
      _
    %p152 = scmp.lt.s32.totalorder %s11, 2
    // Predicated region
    $region21: #{revin_norm.1} parent=5 // pred_check
      %p153 = pneg %p152
    $region22: #{revin_norm.1} parent=5 // pred_check_branch
      %155 = sbr.rel (%p153) target = $region24
    $region23: #{revin_norm.1} parent=5 // pred_region
      // Predicated region
      $region25: #{revin_norm.1} parent=23 // pred_check
        %p156 = pneg %p31
      $region26: #{revin_norm.1} parent=23 // pred_check_branch
        %158 = sbr.rel (%p156) target = $region28
      $region27: #{revin_norm.1} parent=23 // pred_region
        %p159 = scmp.lt.s32.totalorder %s11, 1
        %s160 = scalar_select %p159, %s11, 1
        %s161 = scalar_lea.vmem %s0, %s160
      $region28: #{revin_norm.1} parent=23 // pred_fallthru
        _
    $region24: #{revin_norm.1} parent=5 // pred_fallthru
      _
    %p162 = scmp.le.s32.totalorder 1, %s11
    %p163 = scmp.lt.s32.totalorder %s11, 3
    %p164 = pnand %p162, %p163
    %p165 = pneg %p164
    // Predicated region
    $region29: #{revin_norm.1} parent=5 // pred_check
      _
    $region30: #{revin_norm.1} parent=5 // pred_check_branch
      %167 = sbr.rel (%p164) target = $region32
    $region31: #{revin_norm.1} parent=5 // pred_region
      %s168 = ssub.s32 %s11, 1
      %p169 = scmp.lt.s32.totalorder %s16, 1
      %s170 = scalar_select %p169, %s16, 1
      %s171 = scalar_lea.vmem %s0, %s170
      %p172 = pneg %p37
      %p173 = pneg %p34
      %p174 = pneg %p58
      %p175 = pneg %p55
      %p176 = pneg %p79
      %p177 = pneg %p76
      %p178 = pneg %p105
      %p179 = pneg %p102
      %p180 = scmp.lt.s32.totalorder %s16, 1
      %s181 = scalar_select %p180, %s16, 1
      %s182 = scalar_lea.vmem %s3, %s181
      %p183 = pneg %p131
      %p184 = pneg %p128
      %p185 = scmp.lt.s32.totalorder %s16, 1
      %s186 = scalar_select %p185, %s16, 1
      %s187 = smul.addr %s186, 2
      %s188 = scalar_lea.vmem %s4, %s187
      %p189 = scmp.lt.s32.totalorder %s16, 1
      %s190 = scalar_select %p189, %s16, 1
      %s191 = scalar_lea.vmem %s0, %s190
      %p192 = scmp.lt.s32.totalorder %s16, 1
      %s193 = scalar_select %p192, %s16, 1
      %s194 = scalar_lea.vmem %s3, %s193
      %p195 = scmp.lt.s32.totalorder %s16, 1
      %s196 = scalar_select %p195, %s16, 1
      %s197 = smul.addr %s196, 2
      %s198 = scalar_lea.vmem %s4, %s197
      %v199 = vld [vmem:[%s191] sm:$0x1]
      %v200 = vadd.f32 %v199, 0.0
      %202 = vrot.lane.b32.xlu0 %v200, 120
      %v203 = vpop.permute.xlu0 %202
      %204 = vrot.lane.b32.xlu0 %v200, 112
      %v205 = vpop.permute.xlu0 %204
      %206 = vrot.lane.b32.xlu0 %v200, 104
      %v207 = vpop.permute.xlu0 %206
      %208 = vrot.lane.b32.xlu0 %v200, 96
      %v209 = vpop.permute.xlu0 %208
      %210 = vrot.lane.b32.xlu0 %v200, 88
      %v211 = vpop.permute.xlu0 %210
      %212 = vrot.lane.b32.xlu0 %v200, 80
      %v213 = vpop.permute.xlu0 %212
      %214 = vrot.lane.b32.xlu0 %v200, 72
      %v215 = vpop.permute.xlu0 %214
      %216 = vrot.lane.b32.xlu0 %v200, 64
      %v217 = vpop.permute.xlu0 %216
      %218 = vrot.lane.b32.xlu0 %v200, 56
      %v219 = vpop.permute.xlu0 %218
      %220 = vrot.lane.b32.xlu0 %v200, 48
      %v221 = vpop.permute.xlu0 %220
      %222 = vrot.lane.b32.xlu0 %v200, 40
      %v223 = vpop.permute.xlu0 %222
      %224 = vrot.lane.b32.xlu0 %v200, 32
      %v225 = vpop.permute.xlu0 %224
      %226 = vrot.lane.b32.xlu0 %v200, 24
      %v227 = vpop.permute.xlu0 %226
      %228 = vrot.lane.b32.xlu0 %v200, 16
      %v229 = vpop.permute.xlu0 %228
      %230 = vrot.lane.b32.xlu0 %v200, 8
      %v231 = vpop.permute.xlu0 %230
      %v232 = vcombine.low %v200, %v203
      %v233 = vcombine.low %v205, %v207
      %v234 = vcombine.low %v209, %v211
      %v235 = vcombine.low %v213, %v215
      %v237 = vunpack.c.l.s4 1966171168
      %v238 = vunpack.c.0.s8 %v237
      %v239 = vlaneseq
      %v240 = vshrl.u32 %v239, 7
      %v241 = vsub.s32 %v238, %v240
      %v242 = vrot.slane %v232, %v241
      %v244 = vunpack.c.l.s4 1966171168
      %v245 = vunpack.c.0.s8 %v244
      %v246 = vlaneseq
      %v247 = vshrl.u32 %v246, 7
      %v248 = vsub.s32 %v245, %v247
      %v249 = vrot.slane %v233, %v248
      %v251 = vunpack.c.l.s4 1966171168
      %v252 = vunpack.c.0.s8 %v251
      %v253 = vlaneseq
      %v254 = vshrl.u32 %v253, 7
      %v255 = vsub.s32 %v252, %v254
      %v256 = vrot.slane %v234, %v255
      %v258 = vunpack.c.l.s4 1966171168
      %v259 = vunpack.c.0.s8 %v258
      %v260 = vlaneseq
      %v261 = vshrl.u32 %v260, 7
      %v262 = vsub.s32 %v259, %v261
      %v263 = vrot.slane %v235, %v262
      %v264 = vcombine.low %v242, %v249
      %v265 = vcombine.low %v256, %v263
      %v267 = vunpack.c.l.s4 1966171168
      %v268 = vunpack.c.0.s8 %v267
      %v269 = vlaneseq
      %v270 = vshrl.u32 %v269, 7
      %v271 = vsub.s32 %v268, %v270
      %v272 = vrot.slane %v264, %v271
      %v274 = vunpack.c.l.s4 1966171168
      %v275 = vunpack.c.0.s8 %v274
      %v276 = vlaneseq
      %v277 = vshrl.u32 %v276, 7
      %v278 = vsub.s32 %v275, %v277
      %v279 = vrot.slane %v265, %v278
      %v280 = vcombine.low %v272, %v279
      %v281 = vcombine.low %v217, %v219
      %v282 = vcombine.low %v221, %v223
      %v283 = vcombine.low %v225, %v227
      %v284 = vcombine.low %v229, %v231
      %v286 = vunpack.c.l.s4 1966171168
      %v287 = vunpack.c.0.s8 %v286
      %v288 = vlaneseq
      %v289 = vshrl.u32 %v288, 7
      %v290 = vsub.s32 %v287, %v289
      %v291 = vrot.slane %v281, %v290
      %v293 = vunpack.c.l.s4 1966171168
      %v294 = vunpack.c.0.s8 %v293
      %v295 = vlaneseq
      %v296 = vshrl.u32 %v295, 7
      %v297 = vsub.s32 %v294, %v296
      %v298 = vrot.slane %v282, %v297
      %v300 = vunpack.c.l.s4 1966171168
      %v301 = vunpack.c.0.s8 %v300
      %v302 = vlaneseq
      %v303 = vshrl.u32 %v302, 7
      %v304 = vsub.s32 %v301, %v303
      %v305 = vrot.slane %v283, %v304
      %v307 = vunpack.c.l.s4 1966171168
      %v308 = vunpack.c.0.s8 %v307
      %v309 = vlaneseq
      %v310 = vshrl.u32 %v309, 7
      %v311 = vsub.s32 %v308, %v310
      %v312 = vrot.slane %v284, %v311
      %v313 = vcombine.low %v291, %v298
      %v314 = vcombine.low %v305, %v312
      %v316 = vunpack.c.l.s4 1966171168
      %v317 = vunpack.c.0.s8 %v316
      %v318 = vlaneseq
      %v319 = vshrl.u32 %v318, 7
      %v320 = vsub.s32 %v317, %v319
      %v321 = vrot.slane %v313, %v320
      %v323 = vunpack.c.l.s4 1966171168
      %v324 = vunpack.c.0.s8 %v323
      %v325 = vlaneseq
      %v326 = vshrl.u32 %v325, 7
      %v327 = vsub.s32 %v324, %v326
      %v328 = vrot.slane %v314, %v327
      %v329 = vcombine.low %v321, %v328
      %vm332 = vcmask 64512
      %v333 = vsel %vm332, %v280, 0.0
      %v334 = vsel %vm332, %v329, 0.0
      %v335 = vadd.f32 %v333, %v334
      %v336 = vrot.slane %v335, 4
      %v337 = vadd.f32 %v335, %v336
      %v338 = vrot.slane %v337, 2
      %v339 = vadd.f32 %v337, %v338
      %v340 = vrot.slane %v339, 1
      %v341 = vadd.f32 %v339, %v340
      %v342 = vmul.f32 %v341, 0.0625
      %344 = vrot.lane.b32.xlu0 %v342, 8
      %v345 = vpop.permute.xlu0 %344
      %347 = vrot.lane.b32.xlu0 %v342, 16
      %v348 = vpop.permute.xlu0 %347
      %350 = vrot.lane.b32.xlu0 %v342, 24
      %v351 = vpop.permute.xlu0 %350
      %353 = vrot.lane.b32.xlu0 %v342, 32
      %v354 = vpop.permute.xlu0 %353
      %356 = vrot.lane.b32.xlu0 %v342, 40
      %v357 = vpop.permute.xlu0 %356
      %359 = vrot.lane.b32.xlu0 %v342, 48
      %v360 = vpop.permute.xlu0 %359
      %362 = vrot.lane.b32.xlu0 %v342, 56
      %v363 = vpop.permute.xlu0 %362
      %365 = vrot.lane.b32.xlu0 %v342, 64
      %v366 = vpop.permute.xlu0 %365
      %368 = vrot.lane.b32.xlu0 %v342, 72
      %v369 = vpop.permute.xlu0 %368
      %371 = vrot.lane.b32.xlu0 %v342, 80
      %v372 = vpop.permute.xlu0 %371
      %374 = vrot.lane.b32.xlu0 %v342, 88
      %v375 = vpop.permute.xlu0 %374
      %377 = vrot.lane.b32.xlu0 %v342, 96
      %v378 = vpop.permute.xlu0 %377
      %380 = vrot.lane.b32.xlu0 %v342, 104
      %v381 = vpop.permute.xlu0 %380
      %383 = vrot.lane.b32.xlu0 %v342, 112
      %v384 = vpop.permute.xlu0 %383
      %386 = vrot.lane.b32.xlu0 %v342, 120
      %v387 = vpop.permute.xlu0 %386
      %v389 = vsel %vm332, %v342, %v345
      %vm390 = vcmask 130048
      %v391 = vsel %vm390, %v389, %v348
      %vm392 = vcmask 195584
      %v393 = vsel %vm392, %v391, %v351
      %vm394 = vcmask 261120
      %v395 = vsel %vm394, %v393, %v354
      %vm396 = vcmask 326656
      %v397 = vsel %vm396, %v395, %v357
      %vm398 = vcmask 392192
      %v399 = vsel %vm398, %v397, %v360
      %vm400 = vcmask 457728
      %v401 = vsel %vm400, %v399, %v363
      %vm402 = vcmask 523264
      %v403 = vsel %vm402, %v401, %v366
      %vm404 = vcmask 588800
      %v405 = vsel %vm404, %v403, %v369
      %vm406 = vcmask 654336
      %v407 = vsel %vm406, %v405, %v372
      %vm408 = vcmask 719872
      %v409 = vsel %vm408, %v407, %v375
      %vm410 = vcmask 785408
      %v411 = vsel %vm410, %v409, %v378
      %vm412 = vcmask 850944
      %v413 = vsel %vm412, %v411, %v381
      %vm414 = vcmask 916480
      %v415 = vsel %vm414, %v413, %v384
      %vm416 = vcmask 982016
      %v417 = vsel %vm416, %v415, %v387
      %v418 = vsub.f32 %v199, %v417
      %v419 = vmul.f32 %v418, %v418
      %v420 = vadd.f32 %v419, 0.0
      %422 = vrot.lane.b32.xlu0 %v420, 120
      %v423 = vpop.permute.xlu0 %422
      %424 = vrot.lane.b32.xlu0 %v420, 112
      %v425 = vpop.permute.xlu0 %424
      %426 = vrot.lane.b32.xlu0 %v420, 104
      %v427 = vpop.permute.xlu0 %426
      %428 = vrot.lane.b32.xlu0 %v420, 96
      %v429 = vpop.permute.xlu0 %428
      %430 = vrot.lane.b32.xlu0 %v420, 88
      %v431 = vpop.permute.xlu0 %430
      %432 = vrot.lane.b32.xlu0 %v420, 80
      %v433 = vpop.permute.xlu0 %432
      %434 = vrot.lane.b32.xlu0 %v420, 72
      %v435 = vpop.permute.xlu0 %434
      %436 = vrot.lane.b32.xlu0 %v420, 64
      %v437 = vpop.permute.xlu0 %436
      %438 = vrot.lane.b32.xlu0 %v420, 56
      %v439 = vpop.permute.xlu0 %438
      %440 = vrot.lane.b32.xlu0 %v420, 48
      %v441 = vpop.permute.xlu0 %440
      %442 = vrot.lane.b32.xlu0 %v420, 40
      %v443 = vpop.permute.xlu0 %442
      %444 = vrot.lane.b32.xlu0 %v420, 32
      %v445 = vpop.permute.xlu0 %444
      %446 = vrot.lane.b32.xlu0 %v420, 24
      %v447 = vpop.permute.xlu0 %446
      %448 = vrot.lane.b32.xlu0 %v420, 16
      %v449 = vpop.permute.xlu0 %448
      %450 = vrot.lane.b32.xlu0 %v420, 8
      %v451 = vpop.permute.xlu0 %450
      %v452 = vcombine.low %v420, %v423
      %v453 = vcombine.low %v425, %v427
      %v454 = vcombine.low %v429, %v431
      %v455 = vcombine.low %v433, %v435
      %v457 = vunpack.c.l.s4 1966171168
      %v458 = vunpack.c.0.s8 %v457
      %v459 = vlaneseq
      %v460 = vshrl.u32 %v459, 7
      %v461 = vsub.s32 %v458, %v460
      %v462 = vrot.slane %v452, %v461
      %v464 = vunpack.c.l.s4 1966171168
      %v465 = vunpack.c.0.s8 %v464
      %v466 = vlaneseq
      %v467 = vshrl.u32 %v466, 7
      %v468 = vsub.s32 %v465, %v467
      %v469 = vrot.slane %v453, %v468
      %v471 = vunpack.c.l.s4 1966171168
      %v472 = vunpack.c.0.s8 %v471
      %v473 = vlaneseq
      %v474 = vshrl.u32 %v473, 7
      %v475 = vsub.s32 %v472, %v474
      %v476 = vrot.slane %v454, %v475
      %v478 = vunpack.c.l.s4 1966171168
      %v479 = vunpack.c.0.s8 %v478
      %v480 = vlaneseq
      %v481 = vshrl.u32 %v480, 7
      %v482 = vsub.s32 %v479, %v481
      %v483 = vrot.slane %v455, %v482
      %v484 = vcombine.low %v462, %v469
      %v485 = vcombine.low %v476, %v483
      %v487 = vunpack.c.l.s4 1966171168
      %v488 = vunpack.c.0.s8 %v487
      %v489 = vlaneseq
      %v490 = vshrl.u32 %v489, 7
      %v491 = vsub.s32 %v488, %v490
      %v492 = vrot.slane %v484, %v491
      %v494 = vunpack.c.l.s4 1966171168
      %v495 = vunpack.c.0.s8 %v494
      %v496 = vlaneseq
      %v497 = vshrl.u32 %v496, 7
      %v498 = vsub.s32 %v495, %v497
      %v499 = vrot.slane %v485, %v498
      %v500 = vcombine.low %v492, %v499
      %v501 = vcombine.low %v437, %v439
      %v502 = vcombine.low %v441, %v443
      %v503 = vcombine.low %v445, %v447
      %v504 = vcombine.low %v449, %v451
      %v506 = vunpack.c.l.s4 1966171168
      %v507 = vunpack.c.0.s8 %v506
      %v508 = vlaneseq
      %v509 = vshrl.u32 %v508, 7
      %v510 = vsub.s32 %v507, %v509
      %v511 = vrot.slane %v501, %v510
      %v513 = vunpack.c.l.s4 1966171168
      %v514 = vunpack.c.0.s8 %v513
      %v515 = vlaneseq
      %v516 = vshrl.u32 %v515, 7
      %v517 = vsub.s32 %v514, %v516
      %v518 = vrot.slane %v502, %v517
      %v520 = vunpack.c.l.s4 1966171168
      %v521 = vunpack.c.0.s8 %v520
      %v522 = vlaneseq
      %v523 = vshrl.u32 %v522, 7
      %v524 = vsub.s32 %v521, %v523
      %v525 = vrot.slane %v503, %v524
      %v527 = vunpack.c.l.s4 1966171168
      %v528 = vunpack.c.0.s8 %v527
      %v529 = vlaneseq
      %v530 = vshrl.u32 %v529, 7
      %v531 = vsub.s32 %v528, %v530
      %v532 = vrot.slane %v504, %v531
      %v533 = vcombine.low %v511, %v518
      %v534 = vcombine.low %v525, %v532
      %v536 = vunpack.c.l.s4 1966171168
      %v537 = vunpack.c.0.s8 %v536
      %v538 = vlaneseq
      %v539 = vshrl.u32 %v538, 7
      %v540 = vsub.s32 %v537, %v539
      %v541 = vrot.slane %v533, %v540
      %v543 = vunpack.c.l.s4 1966171168
      %v544 = vunpack.c.0.s8 %v543
      %v545 = vlaneseq
      %v546 = vshrl.u32 %v545, 7
      %v547 = vsub.s32 %v544, %v546
      %v548 = vrot.slane %v534, %v547
      %v549 = vcombine.low %v541, %v548
      %v552 = vsel %vm332, %v500, 0.0
      %v553 = vsel %vm332, %v549, 0.0
      %v554 = vadd.f32 %v552, %v553
      %v555 = vrot.slane %v554, 4
      %v556 = vadd.f32 %v554, %v555
      %v557 = vrot.slane %v556, 2
      %v558 = vadd.f32 %v556, %v557
      %v559 = vrot.slane %v558, 1
      %v560 = vadd.f32 %v558, %v559
      %v561 = vmul.f32 %v560, 0.0625
      %v562 = vadd.f32 %v561, 1e-05
      %v563 = vrsqrt.pop %v562
      %v564 = vmul.f32 %v562, %v563
      %vm565 = vcmp.eq.f32.partialorder %v562, inf
      %v566 = vsel %vm565, %v562, %v564
      %vm567 = vcmp.eq.f32.partialorder %v562, 0.0
      %v568 = vand.u32 %v562, 2147483648
      %v569 = vsel %vm567, %v568, %v566
      %v570 = vrsqrt.pop %v562
      %v571 = vld [vmem:[%s1] sm:$0x1]
      %v572 = vmul.f32 %v571, %v570
      %v573 = vld [vmem:[%s2] sm:$0x1]
      %v574 = vmul.f32 %v342, %v572
      %v575 = vsub.f32 %v573, %v574
      %v577 = vlaneseq
      %v578 = vshrl.u32 %v577, 7
      %v579 = vsub.s32 0, %v578
      %v580 = vrot.slane %v572, %v579
      %581 = vrot.lane.b32.xlu0 %v580, 8
      %v582 = vpop.permute.xlu0 %581
      %584 = vrot.lane.b32.xlu0 %v580, 16
      %v585 = vpop.permute.xlu0 %584
      %587 = vrot.lane.b32.xlu0 %v580, 24
      %v588 = vpop.permute.xlu0 %587
      %590 = vrot.lane.b32.xlu0 %v580, 32
      %v591 = vpop.permute.xlu0 %590
      %593 = vrot.lane.b32.xlu0 %v580, 40
      %v594 = vpop.permute.xlu0 %593
      %596 = vrot.lane.b32.xlu0 %v580, 48
      %v597 = vpop.permute.xlu0 %596
      %599 = vrot.lane.b32.xlu0 %v580, 56
      %v600 = vpop.permute.xlu0 %599
      %602 = vrot.lane.b32.xlu0 %v580, 64
      %v603 = vpop.permute.xlu0 %602
      %605 = vrot.lane.b32.xlu0 %v580, 72
      %v606 = vpop.permute.xlu0 %605
      %608 = vrot.lane.b32.xlu0 %v580, 80
      %v609 = vpop.permute.xlu0 %608
      %611 = vrot.lane.b32.xlu0 %v580, 88
      %v612 = vpop.permute.xlu0 %611
      %614 = vrot.lane.b32.xlu0 %v580, 96
      %v615 = vpop.permute.xlu0 %614
      %617 = vrot.lane.b32.xlu0 %v580, 104
      %v618 = vpop.permute.xlu0 %617
      %620 = vrot.lane.b32.xlu0 %v580, 112
      %v621 = vpop.permute.xlu0 %620
      %623 = vrot.lane.b32.xlu0 %v580, 120
      %v624 = vpop.permute.xlu0 %623
      %v626 = vsel %vm332, %v572, %v582
      %v627 = vsel %vm390, %v626, %v585
      %v628 = vsel %vm392, %v627, %v588
      %v629 = vsel %vm394, %v628, %v591
      %v630 = vsel %vm396, %v629, %v594
      %v631 = vsel %vm398, %v630, %v597
      %v632 = vsel %vm400, %v631, %v600
      %v633 = vsel %vm402, %v632, %v603
      %v634 = vsel %vm404, %v633, %v606
      %v635 = vsel %vm406, %v634, %v609
      %v636 = vsel %vm408, %v635, %v612
      %v637 = vsel %vm410, %v636, %v615
      %v638 = vsel %vm412, %v637, %v618
      %v639 = vsel %vm414, %v638, %v621
      %v640 = vsel %vm416, %v639, %v624
      %v642 = vlaneseq
      %v643 = vshrl.u32 %v642, 7
      %v644 = vsub.s32 0, %v643
      %v645 = vrot.slane %v575, %v644
      %646 = vrot.lane.b32.xlu0 %v645, 8
      %v647 = vpop.permute.xlu0 %646
      %649 = vrot.lane.b32.xlu0 %v645, 16
      %v650 = vpop.permute.xlu0 %649
      %652 = vrot.lane.b32.xlu0 %v645, 24
      %v653 = vpop.permute.xlu0 %652
      %655 = vrot.lane.b32.xlu0 %v645, 32
      %v656 = vpop.permute.xlu0 %655
      %658 = vrot.lane.b32.xlu0 %v645, 40
      %v659 = vpop.permute.xlu0 %658
      %661 = vrot.lane.b32.xlu0 %v645, 48
      %v662 = vpop.permute.xlu0 %661
      %664 = vrot.lane.b32.xlu0 %v645, 56
      %v665 = vpop.permute.xlu0 %664
      %667 = vrot.lane.b32.xlu0 %v645, 64
      %v668 = vpop.permute.xlu0 %667
      %670 = vrot.lane.b32.xlu0 %v645, 72
      %v671 = vpop.permute.xlu0 %670
      %673 = vrot.lane.b32.xlu0 %v645, 80
      %v674 = vpop.permute.xlu0 %673
      %676 = vrot.lane.b32.xlu0 %v645, 88
      %v677 = vpop.permute.xlu0 %676
      %679 = vrot.lane.b32.xlu0 %v645, 96
      %v680 = vpop.permute.xlu0 %679
      %682 = vrot.lane.b32.xlu0 %v645, 104
      %v683 = vpop.permute.xlu0 %682
      %685 = vrot.lane.b32.xlu0 %v645, 112
      %v686 = vpop.permute.xlu0 %685
      %688 = vrot.lane.b32.xlu0 %v645, 120
      %v689 = vpop.permute.xlu0 %688
      %v691 = vsel %vm332, %v575, %v647
      %v692 = vsel %vm390, %v691, %v650
      %v693 = vsel %vm392, %v692, %v653
      %v694 = vsel %vm394, %v693, %v656
      %v695 = vsel %vm396, %v694, %v659
      %v696 = vsel %vm398, %v695, %v662
      %v697 = vsel %vm400, %v696, %v665
      %v698 = vsel %vm402, %v697, %v668
      %v699 = vsel %vm404, %v698, %v671
      %v700 = vsel %vm406, %v699, %v674
      %v701 = vsel %vm408, %v700, %v677
      %v702 = vsel %vm410, %v701, %v680
      %v703 = vsel %vm412, %v702, %v683
      %v704 = vsel %vm414, %v703, %v686
      %v705 = vsel %vm416, %v704, %v689
      %v706 = vmul.f32 %v199, %v640
      %v707 = vadd.f32 %v706, %v705
      %708 = vst [vmem:[%s194] sm:$0x1] %v707
      %vm709 = vcmask 57344
      %710 = vst.msk [vmem:[%s198] sm:$0x1] %vm709, %v342
      %711 = vst.msk [vmem:[%s198 + $0x1] sm:$0x1] %vm709, %v569
      %p712 = scmp.lt.s32.totalorder %s16, 1
      %s713 = scalar_select %p712, %s16, 1
      %s714 = scalar_lea.vmem %s3, %s713
      %p715 = scmp.lt.s32.totalorder %s16, 1
      %s716 = scalar_select %p715, %s16, 1
      %s717 = smul.addr %s716, 2
      %s718 = scalar_lea.vmem %s4, %s717
      // Predicated region
      $region33: #{revin_norm.1} parent=31 // pred_check
        %p719 = pneg %p102
      $region34: #{revin_norm.1} parent=31 // pred_check_branch
        %721 = sbr.rel (%p719) target = $region36
      $region35: #{revin_norm.1} parent=31 // pred_region
        _
      $region36: #{revin_norm.1} parent=31 // pred_fallthru
        _
      // Predicated region
      $region37: #{revin_norm.1} parent=31 // pred_check
        %p722 = pneg %p128
      $region38: #{revin_norm.1} parent=31 // pred_check_branch
        %724 = sbr.rel (%p722) target = $region40
      $region39: #{revin_norm.1} parent=31 // pred_region
        _
      $region40: #{revin_norm.1} parent=31 // pred_fallthru
        _
    $region32: #{revin_norm.1} parent=5 // pred_fallthru
      _
    %p725 = scmp.le.s32.totalorder 2, %s11
    // Predicated region
    $region41: #{revin_norm.1} parent=5 // pred_check
      %p726 = pneg %p725
    $region42: #{revin_norm.1} parent=5 // pred_check_branch
      %728 = sbr.rel (%p726) target = $region44
    $region43: #{revin_norm.1} parent=5 // pred_region
      %s729 = ssub.s32 %s11, 2
      // Predicated region
      $region45: #{revin_norm.1} parent=43 // pred_check
        %p730 = pneg %p108
      $region46: #{revin_norm.1} parent=43 // pred_check_branch
        %732 = sbr.rel (%p730) target = $region48
      $region47: #{revin_norm.1} parent=43 // pred_region
        %p733 = scmp.lt.s32.totalorder %s17, 1
        %s734 = scalar_select %p733, %s17, 1
        %s735 = scalar_lea.vmem %s3, %s734
      $region48: #{revin_norm.1} parent=43 // pred_fallthru
        _
      // Predicated region
      $region49: #{revin_norm.1} parent=43 // pred_check
        %p736 = pneg %p134
      $region50: #{revin_norm.1} parent=43 // pred_check_branch
        %738 = sbr.rel (%p736) target = $region52
      $region51: #{revin_norm.1} parent=43 // pred_region
        %p739 = scmp.lt.s32.totalorder %s17, 1
        %s740 = scalar_select %p739, %s17, 1
        %s741 = smul.addr %s740, 2
        %s742 = scalar_lea.vmem %s4, %s741
      $region52: #{revin_norm.1} parent=43 // pred_fallthru
        _
    $region44: #{revin_norm.1} parent=5 // pred_fallthru
      _
  $region6: #{revin_norm.1} parent=0 // loop_footer
    %s15 = sadd.s32 1, %s11
  $region7: #{revin_norm.1} parent=0 // loop_footer_branch
    %10 = sbr.rel target = $region3
  $region8: #{revin_norm.1} parent=0 // loop_exit
    _

</llo_original>
